<compile_context>
chip_gen: v5e
topology: v5e:2x2
jax: 0.10.0
libtpu: 0.0.40
codegen_flags: <defaults>
</compile_context>

<pallas_src>
import functools

import jax
import jax.numpy as jnp
from jax.experimental import pallas as pl
from jax.experimental.pallas import tpu as pltpu

_LANE = 128        # TPU lane width; batch tiles are multiples of this
_SUB_TILE = 256    # batch columns processed per in-kernel slab (bounds live f32 activations)


def _round_up(x, m):
    return ((x + m - 1) // m) * m


def _qnet_kernel(x_ref, w1_ref, b1_ref, w2_ref, b2_ref, w3_ref, b3_ref,
                 w4_ref, b4_ref, out_ref):
    """One batch tile, feature-major.

    x_ref  : (state_size, bt)   bf16
    wK_ref : (out, in)          bf16   (native PyTorch layout)
    bK_ref : (out, 1)           f32
    out_ref: (action_size, bt)  f32
    """
    bt = x_ref.shape[1]
    sub = min(bt, _SUB_TILE)
    cdt = x_ref.dtype

    def _layer(w_ref, b_ref, x, relu):
        h = jnp.dot(w_ref[...], x, preferred_element_type=jnp.float32) + b_ref[...]
        if relu:
            h = jnp.maximum(h, 0.0).astype(cdt)
        return h

    # Static sub-slab loop (static slices, 128-aligned starts => clean vector loads,
    # no dynamic-lane-offset lowering) keeps the fc2 (128, n) f32 slab small.
    for c0 in range(0, bt, sub):
        cs = min(sub, bt - c0)
        x = x_ref[:, c0:c0 + cs]
        h = _layer(w1_ref, b1_ref, x, True)
        h = _layer(w2_ref, b2_ref, h, True)
        h = _layer(w3_ref, b3_ref, h, True)
        q = _layer(w4_ref, b4_ref, h, False)
        out_ref[:, c0:c0 + cs] = q.astype(out_ref.dtype)


@functools.partial(jax.jit, static_argnames=("batch_tile",))
def qnetwork_forward(state, params, *, batch_tile=None):
    """Pallas-backed QNetwork forward pass.

    state : (B, state_size) float32
    params: dict with w1..w4 in PyTorch (out, in) layout and b1..b4 as (out, 1).
    Returns (B, action_size) float32 Q-values.
    """
    B, S = state.shape
    H1 = params["w1"].shape[0]
    H2 = params["w2"].shape[0]
    H3 = params["w3"].shape[0]
    A = params["w4"].shape[0]

    if batch_tile is None:
        if B <= 2 * _LANE:
            batch_tile = _round_up(max(B, 1), _LANE)
        else:
            # >= 2 grid steps so both v7x TensorCores get a share of the batch;
            # cap at 512 cols to keep the per-step activation/VMEM footprint modest.
            batch_tile = min(512, _round_up(pl.cdiv(B, 2), _LANE))
    if batch_tile % _LANE != 0:
        raise ValueError(f"batch_tile ({batch_tile}) must be a multiple of {_LANE}")

    Bp = _round_up(B, batch_tile)
    grid = (Bp // batch_tile,)

    cdt = jnp.bfloat16
    # Feature-major (lane-dense) input; pad the batch to a whole number of tiles.
    x_t = state.astype(cdt).T                       # (S, B)
    if Bp != B:
        x_t = jnp.pad(x_t, ((0, 0), (0, Bp - B)))

    w1 = params["w1"].astype(cdt); b1 = params["b1"].astype(jnp.float32)
    w2 = params["w2"].astype(cdt); b2 = params["b2"].astype(jnp.float32)
    w3 = params["w3"].astype(cdt); b3 = params["b3"].astype(jnp.float32)
    w4 = params["w4"].astype(cdt); b4 = params["b4"].astype(jnp.float32)

    def _whole(arr):
        # Whole-array block with a constant block index: DMA'd once, VMEM-resident.
        return pl.BlockSpec(arr.shape, lambda i: (0, 0))

    in_specs = [pl.BlockSpec((S, batch_tile), lambda i: (0, i)),
                _whole(w1), _whole(b1),
                _whole(w2), _whole(b2),
                _whole(w3), _whole(b3),
                _whole(w4), _whole(b4)]
    out_specs = pl.BlockSpec((A, batch_tile), lambda i: (0, i))

    flops = 2 * Bp * (S * H1 + H1 * H2 + H2 * H3 + H3 * A)
    bytes_accessed = (x_t.size * 2                                   # bf16 input
                      + 2 * (H1 * S + H2 * H1 + H3 * H2 + A * H3)    # bf16 weights
                      + 4 * (H1 + H2 + H3 + A)                       # f32 biases
                      + 4 * A * Bp)                                  # f32 output

    out_t = pl.pallas_call(
        _qnet_kernel,
        out_shape=jax.ShapeDtypeStruct((A, Bp), jnp.float32),
        grid_spec=pl.GridSpec(
            grid=grid,
            in_specs=in_specs,
            out_specs=out_specs,
        ),
        compiler_params=pltpu.CompilerParams(
            dimension_semantics=("parallel",),
        ),
        cost_estimate=pl.CostEstimate(
            flops=flops, transcendentals=0, bytes_accessed=bytes_accessed),
    )(x_t, w1, b1, w2, b2, w3, b3, w4, b4)

    return out_t[:, :B].T                           # (B, A) float32


def init_qnetwork_params(key, state_size, action_size,
                         fc1_units=64, fc2_units=128, fc3_units=64):
    """Deterministic synthetic init mimicking nn.Linear's U(-1/sqrt(in), 1/sqrt(in)).

    Weights are stored in PyTorch layout (out, in); biases as (out, 1).
    """
    dims = [(state_size, fc1_units),
            (fc1_units, fc2_units),
            (fc2_units, fc3_units),
            (fc3_units, action_size)]
    params = {}
    for idx, (fan_in, fan_out) in enumerate(dims, start=1):
        key, kw, kb = jax.random.split(key, 3)
        bound = 1.0 / (fan_in ** 0.5)
        params[f"w{idx}"] = jax.random.uniform(
            kw, (fan_out, fan_in), jnp.float32, -bound, bound)
        params[f"b{idx}"] = jax.random.uniform(
            kb, (fan_out, 1), jnp.float32, -bound, bound)
    return params


def _reference_forward(state, params):
    """Pure-jnp reference mirroring the kernel's bf16-compute / f32-accumulate path."""
    cdt = jnp.bfloat16

    def layer(x, w, b, relu):
        y = jnp.dot(x, w.astype(cdt).T, preferred_element_type=jnp.float32)
        y = y + b.reshape(1, -1)
        if relu:
            y = jnp.maximum(y, 0.0).astype(cdt)
        return y

    x = state.astype(cdt)
    x = layer(x, params["w1"], params["b1"], True)
    x = layer(x, params["w2"], params["b2"], True)
    x = layer(x, params["w3"], params["b3"], True)
    return layer(x, params["w4"], params["b4"], False)


if __name__ == "__main__":
    key = jax.random.PRNGKey(0)
    k_params, k_s1, k_s2 = jax.random.split(key, 3)

    state_size, action_size = 8, 4
    params = init_qnetwork_params(k_params, state_size, action_size)

    # Small batch: single grid step, batch padded up to one 128-lane tile.
    state_small = jax.random.normal(k_s1, (8, state_size), jnp.float32)
    out_small = jax.block_until_ready(qnetwork_forward(state_small, params))
    ref_small = _reference_forward(state_small, params)
    assert out_small.shape == (8, action_size)
    assert jnp.allclose(out_small, ref_small, atol=2e-2, rtol=2e-2)

    # Larger, non-aligned batch: exercises the multi-step grid + padding path
    # (batch_tile=256 -> 2 parallel grid steps, 128 padded columns).
    state_big = jax.random.normal(k_s2, (384, state_size), jnp.float32)
    out_big = jax.block_until_ready(qnetwork_forward(state_big, params))
    ref_big = _reference_forward(state_big, params)
    assert out_big.shape == (384, action_size)
    assert jnp.allclose(out_big, ref_big, atol=2e-2, rtol=2e-2)

    print("KERNEL_OK")
</pallas_src>

<mosaic_0001>
module attributes {stable_mosaic.version = 11 : i64} {
  func.func @_qnet_kernel(%arg0: i32, %arg1: memref<8x128xbf16, #tpu.memory_space<vmem>>, %arg2: memref<64x8xbf16, #tpu.memory_space<vmem>>, %arg3: memref<64x1xf32, #tpu.memory_space<vmem>>, %arg4: memref<128x64xbf16, #tpu.memory_space<vmem>>, %arg5: memref<128x1xf32, #tpu.memory_space<vmem>>, %arg6: memref<64x128xbf16, #tpu.memory_space<vmem>>, %arg7: memref<64x1xf32, #tpu.memory_space<vmem>>, %arg8: memref<4x64xbf16, #tpu.memory_space<vmem>>, %arg9: memref<4x1xf32, #tpu.memory_space<vmem>>, %arg10: memref<4x128xf32, #tpu.memory_space<vmem>>) attributes {dimension_semantics = [#tpu.dimension_semantics<parallel>], iteration_bounds = array<i64: 1>, scalar_prefetch = 0 : i64, scratch_operands = 0 : i64, tpu.core_type = #tpu.core_type<tc>, window_params = [{transform_indices = @transform_0, window_bounds = array<i64: 8, 128>}, {pipeline_mode = #tpu.pipeline_mode<synchronous>, transform_indices = @transform_1, window_bounds = array<i64: 64, 8>}, {pipeline_mode = #tpu.pipeline_mode<synchronous>, transform_indices = @transform_2, window_bounds = array<i64: 64, 1>}, {pipeline_mode = #tpu.pipeline_mode<synchronous>, transform_indices = @transform_3, window_bounds = array<i64: 128, 64>}, {pipeline_mode = #tpu.pipeline_mode<synchronous>, transform_indices = @transform_4, window_bounds = array<i64: 128, 1>}, {pipeline_mode = #tpu.pipeline_mode<synchronous>, transform_indices = @transform_5, window_bounds = array<i64: 64, 128>}, {pipeline_mode = #tpu.pipeline_mode<synchronous>, transform_indices = @transform_6, window_bounds = array<i64: 64, 1>}, {pipeline_mode = #tpu.pipeline_mode<synchronous>, transform_indices = @transform_7, window_bounds = array<i64: 4, 64>}, {pipeline_mode = #tpu.pipeline_mode<synchronous>, transform_indices = @transform_8, window_bounds = array<i64: 4, 1>}, {transform_indices = @transform_9, window_bounds = array<i64: 4, 128>}]} {
    %c0 = arith.constant 0 : index
    %c0_0 = arith.constant 0 : index
    %0 = vector.load %arg1[%c0, %c0_0] : memref<8x128xbf16, #tpu.memory_space<vmem>>, vector<8x128xbf16>
    %c0_1 = arith.constant 0 : index
    %c0_2 = arith.constant 0 : index
    %1 = vector.load %arg2[%c0_1, %c0_2] : memref<64x8xbf16, #tpu.memory_space<vmem>>, vector<64x8xbf16>
    %cst = arith.constant dense<0.000000e+00> : vector<64x128xf32>
    %2 = tpu.matmul %1, %0, %cst {dimension_numbers = #tpu.dot_dimension_numbers<[1], [0], [0], [1], [0, 0, 1, 1], [], []>} : vector<64x8xbf16>, vector<8x128xbf16>, vector<64x128xf32> -> vector<64x128xf32>
    %c0_3 = arith.constant 0 : index
    %c0_4 = arith.constant 0 : index
    %3 = vector.load %arg3[%c0_3, %c0_4] : memref<64x1xf32, #tpu.memory_space<vmem>>, vector<64x1xf32>
    %4 = vector.broadcast %3 : vector<64x1xf32> to vector<64x128xf32>
    %5 = arith.addf %2, %4 : vector<64x128xf32>
    %cst_5 = arith.constant 0.000000e+00 : f32
    %6 = vector.broadcast %cst_5 : f32 to vector<64x128xf32>
    %7 = arith.maximumf %5, %6 : vector<64x128xf32>
    %8 = arith.truncf %7 : vector<64x128xf32> to vector<64x128xbf16>
    %c0_6 = arith.constant 0 : index
    %c0_7 = arith.constant 0 : index
    %9 = vector.load %arg4[%c0_6, %c0_7] : memref<128x64xbf16, #tpu.memory_space<vmem>>, vector<128x64xbf16>
    %cst_8 = arith.constant dense<0.000000e+00> : vector<128x128xf32>
    %10 = tpu.matmul %9, %8, %cst_8 {dimension_numbers = #tpu.dot_dimension_numbers<[1], [0], [0], [1], [0, 0, 1, 1], [], []>} : vector<128x64xbf16>, vector<64x128xbf16>, vector<128x128xf32> -> vector<128x128xf32>
    %c0_9 = arith.constant 0 : index
    %c0_10 = arith.constant 0 : index
    %11 = vector.load %arg5[%c0_9, %c0_10] : memref<128x1xf32, #tpu.memory_space<vmem>>, vector<128x1xf32>
    %12 = vector.broadcast %11 : vector<128x1xf32> to vector<128x128xf32>
    %13 = arith.addf %10, %12 : vector<128x128xf32>
    %cst_11 = arith.constant 0.000000e+00 : f32
    %14 = vector.broadcast %cst_11 : f32 to vector<128x128xf32>
    %15 = arith.maximumf %13, %14 : vector<128x128xf32>
    %16 = arith.truncf %15 : vector<128x128xf32> to vector<128x128xbf16>
    %c0_12 = arith.constant 0 : index
    %c0_13 = arith.constant 0 : index
    %17 = vector.load %arg6[%c0_12, %c0_13] : memref<64x128xbf16, #tpu.memory_space<vmem>>, vector<64x128xbf16>
    %cst_14 = arith.constant dense<0.000000e+00> : vector<64x128xf32>
    %18 = tpu.matmul %17, %16, %cst_14 {dimension_numbers = #tpu.dot_dimension_numbers<[1], [0], [0], [1], [0, 0, 1, 1], [], []>} : vector<64x128xbf16>, vector<128x128xbf16>, vector<64x128xf32> -> vector<64x128xf32>
    %c0_15 = arith.constant 0 : index
    %c0_16 = arith.constant 0 : index
    %19 = vector.load %arg7[%c0_15, %c0_16] : memref<64x1xf32, #tpu.memory_space<vmem>>, vector<64x1xf32>
    %20 = vector.broadcast %19 : vector<64x1xf32> to vector<64x128xf32>
    %21 = arith.addf %18, %20 : vector<64x128xf32>
    %cst_17 = arith.constant 0.000000e+00 : f32
    %22 = vector.broadcast %cst_17 : f32 to vector<64x128xf32>
    %23 = arith.maximumf %21, %22 : vector<64x128xf32>
    %24 = arith.truncf %23 : vector<64x128xf32> to vector<64x128xbf16>
    %c0_18 = arith.constant 0 : index
    %c0_19 = arith.constant 0 : index
    %25 = vector.load %arg8[%c0_18, %c0_19] : memref<4x64xbf16, #tpu.memory_space<vmem>>, vector<4x64xbf16>
    %cst_20 = arith.constant dense<0.000000e+00> : vector<4x128xf32>
    %26 = tpu.matmul %25, %24, %cst_20 {dimension_numbers = #tpu.dot_dimension_numbers<[1], [0], [0], [1], [0, 0, 1, 1], [], []>} : vector<4x64xbf16>, vector<64x128xbf16>, vector<4x128xf32> -> vector<4x128xf32>
    %c0_21 = arith.constant 0 : index
    %c0_22 = arith.constant 0 : index
    %27 = vector.load %arg9[%c0_21, %c0_22] : memref<4x1xf32, #tpu.memory_space<vmem>>, vector<4x1xf32>
    %28 = vector.broadcast %27 : vector<4x1xf32> to vector<4x128xf32>
    %29 = arith.addf %26, %28 : vector<4x128xf32>
    %c0_23 = arith.constant 0 : index
    %c0_24 = arith.constant 0 : index
    %30 = vector.load %arg10[%c0_23, %c0_24] : memref<4x128xf32, #tpu.memory_space<vmem>>, vector<4x128xf32>
    tpu.vector_store %arg10[%c0_23, %c0_24], %29 {strides = array<i32>} : memref<4x128xf32, #tpu.memory_space<vmem>>, vector<4x128xf32>,
    return
  }
  func.func @transform_0(%arg0: i32) -> (i32, i32) {
    %c0_i32 = arith.constant 0 : i32
    %c0_i32_0 = arith.constant 0 : i32
    return %c0_i32, %arg0 : i32, i32
  }
  func.func @transform_1(%arg0: i32) -> (i32, i32) {
    %c0_i32 = arith.constant 0 : i32
    %c0_i32_0 = arith.constant 0 : i32
    %c0_i32_1 = arith.constant 0 : i32
    return %c0_i32, %c0_i32_0 : i32, i32
  }
  func.func @transform_2(%arg0: i32) -> (i32, i32) {
    %c0_i32 = arith.constant 0 : i32
    %c0_i32_0 = arith.constant 0 : i32
    %c0_i32_1 = arith.constant 0 : i32
    return %c0_i32, %c0_i32_0 : i32, i32
  }
  func.func @transform_3(%arg0: i32) -> (i32, i32) {
    %c0_i32 = arith.constant 0 : i32
    %c0_i32_0 = arith.constant 0 : i32
    %c0_i32_1 = arith.constant 0 : i32
    return %c0_i32, %c0_i32_0 : i32, i32
  }
  func.func @transform_4(%arg0: i32) -> (i32, i32) {
    %c0_i32 = arith.constant 0 : i32
    %c0_i32_0 = arith.constant 0 : i32
    %c0_i32_1 = arith.constant 0 : i32
    return %c0_i32, %c0_i32_0 : i32, i32
  }
  func.func @transform_5(%arg0: i32) -> (i32, i32) {
    %c0_i32 = arith.constant 0 : i32
    %c0_i32_0 = arith.constant 0 : i32
    %c0_i32_1 = arith.constant 0 : i32
    return %c0_i32, %c0_i32_0 : i32, i32
  }
  func.func @transform_6(%arg0: i32) -> (i32, i32) {
    %c0_i32 = arith.constant 0 : i32
    %c0_i32_0 = arith.constant 0 : i32
    %c0_i32_1 = arith.constant 0 : i32
    return %c0_i32, %c0_i32_0 : i32, i32
  }
  func.func @transform_7(%arg0: i32) -> (i32, i32) {
    %c0_i32 = arith.constant 0 : i32
    %c0_i32_0 = arith.constant 0 : i32
    %c0_i32_1 = arith.constant 0 : i32
    return %c0_i32, %c0_i32_0 : i32, i32
  }
  func.func @transform_8(%arg0: i32) -> (i32, i32) {
    %c0_i32 = arith.constant 0 : i32
    %c0_i32_0 = arith.constant 0 : i32
    %c0_i32_1 = arith.constant 0 : i32
    return %c0_i32, %c0_i32_0 : i32, i32
  }
  func.func @transform_9(%arg0: i32) -> (i32, i32) {
    %c0_i32 = arith.constant 0 : i32
    %c0_i32_0 = arith.constant 0 : i32
    return %c0_i32, %arg0 : i32, i32
  }
}

</mosaic_0001>

<llo_original>
// kernel: qnetwork_forward.1
$region0: #{qnetwork_forward.1}
  #allocation0 [shape = 'u32[]', space=smem, size = 0x4, offset = 0x4, fixed_abs, tag = 'smem constant byte address 0x4 - core index']
  #allocation1 [shape = 'u32[72,128]{1,0:T(1,128)}', space=vmem, size = 0x9000, scoped, tag = 'internal scratch']
  %s0 = inlined_call_operand.vmem [shape: bf16[8,128], index: 0, kind: input, shape index: {}]
  %s1 = inlined_call_operand.vmem [shape: bf16[64,8], index: 1, kind: input, shape index: {}]
  %s2 = inlined_call_operand.vmem [shape: f32[64,1], index: 2, kind: input, shape index: {}]
  %s3 = inlined_call_operand.vmem [shape: bf16[128,64], index: 3, kind: input, shape index: {}]
  %s4 = inlined_call_operand.vmem [shape: f32[128,1], index: 4, kind: input, shape index: {}]
  %s5 = inlined_call_operand.vmem [shape: bf16[64,128], index: 5, kind: input, shape index: {}]
  %s6 = inlined_call_operand.vmem [shape: f32[64,1], index: 6, kind: input, shape index: {}]
  %s7 = inlined_call_operand.vmem [shape: bf16[4,64], index: 7, kind: input, shape index: {}]
  %s8 = inlined_call_operand.vmem [shape: f32[4,1], index: 8, kind: input, shape index: {}]
  %s9 = inlined_call_operand.vmem [shape: f32[4,128], index: 9, kind: output, shape index: {}]
  %s10 = sld [smem:[#allocation0]]
  $region46: #{qnetwork_forward.1} parent=0
    _
  %s12 = ssub.s32 1, %s10
  %s13 = scalar_select 0, %s12, %s10
  // Predicated region
  $region2: #{qnetwork_forward.1} parent=0 // pred_check
    _
  $region3: #{qnetwork_forward.1} parent=0 // pred_check_branch
    %15 = sbr.rel (0) target = $region5
  $region4: #{qnetwork_forward.1} parent=0 // pred_region
    _
  $region5: #{qnetwork_forward.1} parent=0 // pred_fallthru
    _
  // Predicated region
  $region6: #{qnetwork_forward.1} parent=0 // pred_check
    _
  $region7: #{qnetwork_forward.1} parent=0 // pred_check_branch
    %17 = sbr.rel (0) target = $region9
  $region8: #{qnetwork_forward.1} parent=0 // pred_region
    _
  $region9: #{qnetwork_forward.1} parent=0 // pred_fallthru
    _
  // Predicated region
  $region10: #{qnetwork_forward.1} parent=0 // pred_check
    _
  $region11: #{qnetwork_forward.1} parent=0 // pred_check_branch
    %19 = sbr.rel (0) target = $region13
  $region12: #{qnetwork_forward.1} parent=0 // pred_region
    _
  $region13: #{qnetwork_forward.1} parent=0 // pred_fallthru
    _
  // Predicated region
  $region14: #{qnetwork_forward.1} parent=0 // pred_check
    _
  $region15: #{qnetwork_forward.1} parent=0 // pred_check_branch
    %21 = sbr.rel (0) target = $region17
  $region16: #{qnetwork_forward.1} parent=0 // pred_region
    _
  $region17: #{qnetwork_forward.1} parent=0 // pred_fallthru
    _
  // Predicated region
  $region18: #{qnetwork_forward.1} parent=0 // pred_check
    _
  $region19: #{qnetwork_forward.1} parent=0 // pred_check_branch
    %23 = sbr.rel (0) target = $region21
  $region20: #{qnetwork_forward.1} parent=0 // pred_region
    _
  $region21: #{qnetwork_forward.1} parent=0 // pred_fallthru
    _
  // Predicated region
  $region22: #{qnetwork_forward.1} parent=0 // pred_check
    _
  $region23: #{qnetwork_forward.1} parent=0 // pred_check_branch
    %25 = sbr.rel (0) target = $region25
  $region24: #{qnetwork_forward.1} parent=0 // pred_region
    _
  $region25: #{qnetwork_forward.1} parent=0 // pred_fallthru
    _
  // Predicated region
  $region26: #{qnetwork_forward.1} parent=0 // pred_check
    _
  $region27: #{qnetwork_forward.1} parent=0 // pred_check_branch
    %27 = sbr.rel (0) target = $region29
  $region28: #{qnetwork_forward.1} parent=0 // pred_region
    _
  $region29: #{qnetwork_forward.1} parent=0 // pred_fallthru
    _
  // Predicated region
  $region30: #{qnetwork_forward.1} parent=0 // pred_check
    _
  $region31: #{qnetwork_forward.1} parent=0 // pred_check_branch
    %29 = sbr.rel (0) target = $region33
  $region32: #{qnetwork_forward.1} parent=0 // pred_region
    _
  $region33: #{qnetwork_forward.1} parent=0 // pred_fallthru
    _
  // Predicated region
  $region34: #{qnetwork_forward.1} parent=0 // pred_check
    _
  $region35: #{qnetwork_forward.1} parent=0 // pred_check_branch
    %31 = sbr.rel (0) target = $region37
  $region36: #{qnetwork_forward.1} parent=0 // pred_region
    _
  $region37: #{qnetwork_forward.1} parent=0 // pred_fallthru
    _
  %v33 = vld [vmem:[%s0] sm:$0xf]
  %v34 = vld [vmem:[%s1] sm:$0xf]
  %v35 = vld [vmem:[%s1 + $0x4] sm:$0xf]
  %v36 = vld [vmem:[%s1 + $0x8] sm:$0xf]
  %v37 = vld [vmem:[%s1 + $0xc] sm:$0xf]
  %v38 = vld [vmem:[%s1 + $0x10] sm:$0xf]
  %v39 = vld [vmem:[%s1 + $0x14] sm:$0xf]
  %v40 = vld [vmem:[%s1 + $0x18] sm:$0xf]
  %v41 = vld [vmem:[%s1 + $0x1c] sm:$0xf]
  %v42 = vld [vmem:[%s2] sm:$0xff]
  %v43 = vld [vmem:[%s2 + $0x8] sm:$0xff]
  %v44 = vld [vmem:[%s2 + $0x10] sm:$0xff]
  %v45 = vld [vmem:[%s2 + $0x18] sm:$0xff]
  %v46 = vld [vmem:[%s2 + $0x20] sm:$0xff]
  %v47 = vld [vmem:[%s2 + $0x28] sm:$0xff]
  %v48 = vld [vmem:[%s2 + $0x30] sm:$0xff]
  %v49 = vld [vmem:[%s2 + $0x38] sm:$0xff]
  %51 = vset.pattern.permute.xlu0 0
  %52 = vperm.xlu0 %51, %v42
  %v53 = vpop.permute.xlu0 %52
  %56 = vset.pattern.permute.xlu0 0
  %57 = vperm.xlu0 %56, %v43
  %v58 = vpop.permute.xlu0 %57
  %61 = vset.pattern.permute.xlu0 0
  %62 = vperm.xlu0 %61, %v44
  %v63 = vpop.permute.xlu0 %62
  %66 = vset.pattern.permute.xlu0 0
  %67 = vperm.xlu0 %66, %v45
  %v68 = vpop.permute.xlu0 %67
  %71 = vset.pattern.permute.xlu0 0
  %72 = vperm.xlu0 %71, %v46
  %v73 = vpop.permute.xlu0 %72
  %76 = vset.pattern.permute.xlu0 0
  %77 = vperm.xlu0 %76, %v47
  %v78 = vpop.permute.xlu0 %77
  %81 = vset.pattern.permute.xlu0 0
  %82 = vperm.xlu0 %81, %v48
  %v83 = vpop.permute.xlu0 %82
  %86 = vset.pattern.permute.xlu0 0
  %87 = vperm.xlu0 %86, %v49
  %v88 = vpop.permute.xlu0 %87
  %v98 = vunpack.c.l.b16 %v34
  %v99 = vunpack.c.l.b16 %v35
  %v100 = vunpack.c.l.b16 %v36
  %v101 = vunpack.c.l.b16 %v37
  %v102 = vunpack.c.l.b16 %v38
  %v103 = vunpack.c.l.b16 %v39
  %v104 = vunpack.c.l.b16 %v40
  %v105 = vunpack.c.l.b16 %v41
  %v106 = vpack.c.b16 %v99, %v98
  %v107 = vpack.c.b16 %v101, %v100
  %v108 = vpack.c.b16 %v103, %v102
  %v109 = vpack.c.b16 %v105, %v104
  %vm110 = vcmask 64512
  %v112 = vsel %vm110, %v106, 0
  %v115 = vsel %vm110, %v107, 0
  %v118 = vsel %vm110, %v108, 0
  %v121 = vsel %vm110, %v109, 0
  %vm123 = vcmask 1043456
  %v125 = vsel %vm123, %v33, 0
  %127 = vmatpush.bf16.msra.mxu0 0
  %128 = vmatpush.bf16.msra.mxu0 0
  %129 = vmatpush.bf16.msra.mxu0 0
  %130 = vmatpush.bf16.msra.mxu0 0
  %131 = vmatpush.bf16.msra.mxu0 0
  %132 = vmatpush.bf16.msra.mxu0 0
  %133 = vmatpush.bf16.msra.mxu0 0
  %134 = vmatpush.bf16.msra.mxu0 %v125
  %135 = vmatmul.bf16.gmra.mxu0 %v112
  %v136 = vpop.f32.mrf.mxu0
  %v137 = vadd.f32 %v53, %v136
  %v138 = vpop.f32.mrf.mxu0
  %v139 = vadd.f32 %v58, %v138
  %140 = vmatmul.bf16.gmra.mxu0 %v115
  %v141 = vpop.f32.mrf.mxu0
  %v142 = vadd.f32 %v63, %v141
  %v143 = vpop.f32.mrf.mxu0
  %v144 = vadd.f32 %v68, %v143
  %145 = vmatmul.bf16.gmra.mxu0 %v118
  %v146 = vpop.f32.mrf.mxu0
  %v147 = vadd.f32 %v73, %v146
  %v148 = vpop.f32.mrf.mxu0
  %v149 = vadd.f32 %v78, %v148
  %150 = vmatmul.bf16.gmra.mxu0 %v121
  %v151 = vpop.f32.mrf.mxu0
  %v152 = vadd.f32 %v83, %v151
  %v153 = vpop.f32.mrf.mxu0
  %v154 = vadd.f32 %v88, %v153
  %155 = vdwg.mxu0
  %v156 = vmax.f32 %v137, 0.0
  %v157 = vmax.f32 %v139, 0.0
  %v158 = vmax.f32 %v142, 0.0
  %v159 = vmax.f32 %v144, 0.0
  %v160 = vmax.f32 %v147, 0.0
  %v161 = vmax.f32 %v149, 0.0
  %v162 = vmax.f32 %v152, 0.0
  %v163 = vmax.f32 %v154, 0.0
  %v164 = vpack.c.bf16 %v157, %v156
  %v165 = vpack.c.bf16 %v159, %v158
  %v166 = vpack.c.bf16 %v161, %v160
  %v167 = vpack.c.bf16 %v163, %v162
  %v168 = vld [vmem:[%s3] sm:$0xf]
  %v169 = vld [vmem:[%s3 + $0x4] sm:$0xf]
  %v170 = vld [vmem:[%s3 + $0x8] sm:$0xf]
  %v171 = vld [vmem:[%s3 + $0xc] sm:$0xf]
  %v172 = vld [vmem:[%s3 + $0x10] sm:$0xf]
  %v173 = vld [vmem:[%s3 + $0x14] sm:$0xf]
  %v174 = vld [vmem:[%s3 + $0x18] sm:$0xf]
  %v175 = vld [vmem:[%s3 + $0x1c] sm:$0xf]
  %v176 = vld [vmem:[%s3 + $0x20] sm:$0xf]
  %v177 = vld [vmem:[%s3 + $0x24] sm:$0xf]
  %v178 = vld [vmem:[%s3 + $0x28] sm:$0xf]
  %v179 = vld [vmem:[%s3 + $0x2c] sm:$0xf]
  %v180 = vld [vmem:[%s3 + $0x30] sm:$0xf]
  %v181 = vld [vmem:[%s3 + $0x34] sm:$0xf]
  %v182 = vld [vmem:[%s3 + $0x38] sm:$0xf]
  %v183 = vld [vmem:[%s3 + $0x3c] sm:$0xf]
  %v184 = vld [vmem:[%s4] sm:$0xff]
  %v185 = vld [vmem:[%s4 + $0x8] sm:$0xff]
  %v186 = vld [vmem:[%s4 + $0x10] sm:$0xff]
  %v187 = vld [vmem:[%s4 + $0x18] sm:$0xff]
  %v188 = vld [vmem:[%s4 + $0x20] sm:$0xff]
  %v189 = vld [vmem:[%s4 + $0x28] sm:$0xff]
  %v190 = vld [vmem:[%s4 + $0x30] sm:$0xff]
  %v191 = vld [vmem:[%s4 + $0x38] sm:$0xff]
  %v192 = vld [vmem:[%s4 + $0x40] sm:$0xff]
  %v193 = vld [vmem:[%s4 + $0x48] sm:$0xff]
  %v194 = vld [vmem:[%s4 + $0x50] sm:$0xff]
  %v195 = vld [vmem:[%s4 + $0x58] sm:$0xff]
  %v196 = vld [vmem:[%s4 + $0x60] sm:$0xff]
  %v197 = vld [vmem:[%s4 + $0x68] sm:$0xff]
  %v198 = vld [vmem:[%s4 + $0x70] sm:$0xff]
  %v199 = vld [vmem:[%s4 + $0x78] sm:$0xff]
  %201 = vset.pattern.permute.xlu0 0
  %202 = vperm.xlu0 %201, %v184
  %v203 = vpop.permute.xlu0 %202
  %206 = vset.pattern.permute.xlu0 0
  %207 = vperm.xlu0 %206, %v185
  %v208 = vpop.permute.xlu0 %207
  %211 = vset.pattern.permute.xlu0 0
  %212 = vperm.xlu0 %211, %v186
  %v213 = vpop.permute.xlu0 %212
  %216 = vset.pattern.permute.xlu0 0
  %217 = vperm.xlu0 %216, %v187
  %v218 = vpop.permute.xlu0 %217
  %221 = vset.pattern.permute.xlu0 0
  %222 = vperm.xlu0 %221, %v188
  %v223 = vpop.permute.xlu0 %222
  %226 = vset.pattern.permute.xlu0 0
  %227 = vperm.xlu0 %226, %v189
  %v228 = vpop.permute.xlu0 %227
  %231 = vset.pattern.permute.xlu0 0
  %232 = vperm.xlu0 %231, %v190
  %v233 = vpop.permute.xlu0 %232
  %236 = vset.pattern.permute.xlu0 0
  %237 = vperm.xlu0 %236, %v191
  %v238 = vpop.permute.xlu0 %237
  %241 = vset.pattern.permute.xlu0 0
  %242 = vperm.xlu0 %241, %v192
  %v243 = vpop.permute.xlu0 %242
  %246 = vset.pattern.permute.xlu0 0
  %247 = vperm.xlu0 %246, %v193
  %v248 = vpop.permute.xlu0 %247
  %251 = vset.pattern.permute.xlu0 0
  %252 = vperm.xlu0 %251, %v194
  %v253 = vpop.permute.xlu0 %252
  %256 = vset.pattern.permute.xlu0 0
  %257 = vperm.xlu0 %256, %v195
  %v258 = vpop.permute.xlu0 %257
  %261 = vset.pattern.permute.xlu0 0
  %262 = vperm.xlu0 %261, %v196
  %v263 = vpop.permute.xlu0 %262
  %266 = vset.pattern.permute.xlu0 0
  %267 = vperm.xlu0 %266, %v197
  %v268 = vpop.permute.xlu0 %267
  %271 = vset.pattern.permute.xlu0 0
  %272 = vperm.xlu0 %271, %v198
  %v273 = vpop.permute.xlu0 %272
  %276 = vset.pattern.permute.xlu0 0
  %277 = vperm.xlu0 %276, %v199
  %v278 = vpop.permute.xlu0 %277
  %v296 = vunpack.c.l.b16 %v168
  %v297 = vunpack.c.l.b16 %v169
  %v298 = vunpack.c.l.b16 %v170
  %v299 = vunpack.c.l.b16 %v171
  %v300 = vunpack.c.l.b16 %v172
  %v301 = vunpack.c.l.b16 %v173
  %v302 = vunpack.c.l.b16 %v174
  %v303 = vunpack.c.l.b16 %v175
  %v304 = vunpack.c.l.b16 %v176
  %v305 = vunpack.c.l.b16 %v177
  %v306 = vunpack.c.l.b16 %v178
  %v307 = vunpack.c.l.b16 %v179
  %v308 = vunpack.c.l.b16 %v180
  %v309 = vunpack.c.l.b16 %v181
  %v310 = vunpack.c.l.b16 %v182
  %v311 = vunpack.c.l.b16 %v183
  %v312 = vpack.c.b16 %v297, %v296
  %v313 = vpack.c.b16 %v299, %v298
  %v314 = vpack.c.b16 %v301, %v300
  %v315 = vpack.c.b16 %v303, %v302
  %v316 = vpack.c.b16 %v305, %v304
  %v317 = vpack.c.b16 %v307, %v306
  %v318 = vpack.c.b16 %v309, %v308
  %v319 = vpack.c.b16 %v311, %v310
  %vm320 = vcmask 523264
  %v322 = vsel %vm320, %v312, 0
  %v325 = vsel %vm320, %v313, 0
  %v328 = vsel %vm320, %v314, 0
  %v331 = vsel %vm320, %v315, 0
  %v334 = vsel %vm320, %v316, 0
  %v337 = vsel %vm320, %v317, 0
  %v340 = vsel %vm320, %v318, 0
  %v343 = vsel %vm320, %v319, 0
  %345 = vmatpush.bf16.msra.mxu0 0
  %346 = vmatpush.bf16.msra.mxu0 0
  %347 = vmatpush.bf16.msra.mxu0 0
  %348 = vmatpush.bf16.msra.mxu0 0
  %349 = vmatpush.bf16.msra.mxu0 %v167
  %350 = vmatpush.bf16.msra.mxu0 %v166
  %351 = vmatpush.bf16.msra.mxu0 %v165
  %352 = vmatpush.bf16.msra.mxu0 %v164
  %353 = vmatmul.bf16.gmra.mxu0 %v322
  %v354 = vpop.f32.mrf.mxu0
  %v355 = vadd.f32 %v203, %v354
  %v356 = vpop.f32.mrf.mxu0
  %v357 = vadd.f32 %v208, %v356
  %358 = vmatmul.bf16.gmra.mxu0 %v325
  %v359 = vpop.f32.mrf.mxu0
  %v360 = vadd.f32 %v213, %v359
  %v361 = vpop.f32.mrf.mxu0
  %v362 = vadd.f32 %v218, %v361
  %363 = vmatmul.bf16.gmra.mxu0 %v328
  %v364 = vpop.f32.mrf.mxu0
  %v365 = vadd.f32 %v223, %v364
  %v366 = vpop.f32.mrf.mxu0
  %v367 = vadd.f32 %v228, %v366
  %368 = vmatmul.bf16.gmra.mxu0 %v331
  %v369 = vpop.f32.mrf.mxu0
  %v370 = vadd.f32 %v233, %v369
  %v371 = vpop.f32.mrf.mxu0
  %v372 = vadd.f32 %v238, %v371
  %373 = vmatmul.bf16.gmra.mxu0 %v334
  %v374 = vpop.f32.mrf.mxu0
  %v375 = vadd.f32 %v243, %v374
  %v376 = vpop.f32.mrf.mxu0
  %v377 = vadd.f32 %v248, %v376
  %378 = vmatmul.bf16.gmra.mxu0 %v337
  %v379 = vpop.f32.mrf.mxu0
  %v380 = vadd.f32 %v253, %v379
  %v381 = vpop.f32.mrf.mxu0
  %v382 = vadd.f32 %v258, %v381
  %383 = vmatmul.bf16.gmra.mxu0 %v340
  %v384 = vpop.f32.mrf.mxu0
  %v385 = vadd.f32 %v263, %v384
  %v386 = vpop.f32.mrf.mxu0
  %v387 = vadd.f32 %v268, %v386
  %388 = vmatmul.bf16.gmra.mxu0 %v343
  %v389 = vpop.f32.mrf.mxu0
  %v390 = vadd.f32 %v273, %v389
  %v391 = vpop.f32.mrf.mxu0
  %v392 = vadd.f32 %v278, %v391
  %393 = vdwg.mxu0
  %v394 = vmax.f32 %v355, 0.0
  %v395 = vmax.f32 %v357, 0.0
  %v396 = vmax.f32 %v360, 0.0
  %v397 = vmax.f32 %v362, 0.0
  %v398 = vmax.f32 %v365, 0.0
  %v399 = vmax.f32 %v367, 0.0
  %v400 = vmax.f32 %v370, 0.0
  %v401 = vmax.f32 %v372, 0.0
  %v402 = vmax.f32 %v375, 0.0
  %v403 = vmax.f32 %v377, 0.0
  %v404 = vmax.f32 %v380, 0.0
  %v405 = vmax.f32 %v382, 0.0
  %v406 = vmax.f32 %v385, 0.0
  %v407 = vmax.f32 %v387, 0.0
  %v408 = vmax.f32 %v390, 0.0
  %v409 = vmax.f32 %v392, 0.0
  %v410 = vpack.c.bf16 %v395, %v394
  %v411 = vpack.c.bf16 %v397, %v396
  %v412 = vpack.c.bf16 %v399, %v398
  %v413 = vpack.c.bf16 %v401, %v400
  %v414 = vpack.c.bf16 %v403, %v402
  %v415 = vpack.c.bf16 %v405, %v404
  %v416 = vpack.c.bf16 %v407, %v406
  %v417 = vpack.c.bf16 %v409, %v408
  %v418 = vld [vmem:[%s5] sm:$0xf]
  %v419 = vld [vmem:[%s5 + $0x4] sm:$0xf]
  %v420 = vld [vmem:[%s5 + $0x8] sm:$0xf]
  %v421 = vld [vmem:[%s5 + $0xc] sm:$0xf]
  %v422 = vld [vmem:[%s5 + $0x10] sm:$0xf]
  %v423 = vld [vmem:[%s5 + $0x14] sm:$0xf]
  %v424 = vld [vmem:[%s5 + $0x18] sm:$0xf]
  %v425 = vld [vmem:[%s5 + $0x1c] sm:$0xf]
  %v426 = vld [vmem:[%s6] sm:$0xff]
  %v427 = vld [vmem:[%s6 + $0x8] sm:$0xff]
  %v428 = vld [vmem:[%s6 + $0x10] sm:$0xff]
  %v429 = vld [vmem:[%s6 + $0x18] sm:$0xff]
  %v430 = vld [vmem:[%s6 + $0x20] sm:$0xff]
  %v431 = vld [vmem:[%s6 + $0x28] sm:$0xff]
  %v432 = vld [vmem:[%s6 + $0x30] sm:$0xff]
  %v433 = vld [vmem:[%s6 + $0x38] sm:$0xff]
  %435 = vset.pattern.permute.xlu0 0
  %436 = vperm.xlu0 %435, %v426
  %v437 = vpop.permute.xlu0 %436
  %440 = vset.pattern.permute.xlu0 0
  %441 = vperm.xlu0 %440, %v427
  %v442 = vpop.permute.xlu0 %441
  %445 = vset.pattern.permute.xlu0 0
  %446 = vperm.xlu0 %445, %v428
  %v447 = vpop.permute.xlu0 %446
  %450 = vset.pattern.permute.xlu0 0
  %451 = vperm.xlu0 %450, %v429
  %v452 = vpop.permute.xlu0 %451
  %455 = vset.pattern.permute.xlu0 0
  %456 = vperm.xlu0 %455, %v430
  %v457 = vpop.permute.xlu0 %456
  %460 = vset.pattern.permute.xlu0 0
  %461 = vperm.xlu0 %460, %v431
  %v462 = vpop.permute.xlu0 %461
  %465 = vset.pattern.permute.xlu0 0
  %466 = vperm.xlu0 %465, %v432
  %v467 = vpop.permute.xlu0 %466
  %470 = vset.pattern.permute.xlu0 0
  %471 = vperm.xlu0 %470, %v433
  %v472 = vpop.permute.xlu0 %471
  %v482 = vunpack.c.l.b16 %v418
  %v483 = vunpack.c.l.b16 %v419
  %v484 = vunpack.c.l.b16 %v420
  %v485 = vunpack.c.l.b16 %v421
  %v486 = vunpack.c.l.b16 %v422
  %v487 = vunpack.c.l.b16 %v423
  %v488 = vunpack.c.l.b16 %v424
  %v489 = vunpack.c.l.b16 %v425
  %v490 = vpack.c.b16 %v483, %v482
  %v491 = vpack.c.b16 %v485, %v484
  %v492 = vpack.c.b16 %v487, %v486
  %v493 = vpack.c.b16 %v489, %v488
  %498 = vmatpush.bf16.msra.mxu0 %v417
  %499 = vmatpush.bf16.msra.mxu0 %v416
  %500 = vmatpush.bf16.msra.mxu0 %v415
  %501 = vmatpush.bf16.msra.mxu0 %v414
  %502 = vmatpush.bf16.msra.mxu0 %v413
  %503 = vmatpush.bf16.msra.mxu0 %v412
  %504 = vmatpush.bf16.msra.mxu0 %v411
  %505 = vmatpush.bf16.msra.mxu0 %v410
  %506 = vmatmul.bf16.gmra.mxu0 %v490
  %v507 = vpop.f32.mrf.mxu0
  %v508 = vadd.f32 %v437, %v507
  %v509 = vpop.f32.mrf.mxu0
  %v510 = vadd.f32 %v442, %v509
  %511 = vmatmul.bf16.gmra.mxu0 %v491
  %v512 = vpop.f32.mrf.mxu0
  %v513 = vadd.f32 %v447, %v512
  %v514 = vpop.f32.mrf.mxu0
  %v515 = vadd.f32 %v452, %v514
  %516 = vmatmul.bf16.gmra.mxu0 %v492
  %v517 = vpop.f32.mrf.mxu0
  %v518 = vadd.f32 %v457, %v517
  %v519 = vpop.f32.mrf.mxu0
  %v520 = vadd.f32 %v462, %v519
  %521 = vmatmul.bf16.gmra.mxu0 %v493
  %v522 = vpop.f32.mrf.mxu0
  %v523 = vadd.f32 %v467, %v522
  %v524 = vpop.f32.mrf.mxu0
  %v525 = vadd.f32 %v472, %v524
  %526 = vdwg.mxu0
  %v527 = vmax.f32 %v508, 0.0
  %v528 = vmax.f32 %v510, 0.0
  %v529 = vmax.f32 %v513, 0.0
  %v530 = vmax.f32 %v515, 0.0
  %v531 = vmax.f32 %v518, 0.0
  %v532 = vmax.f32 %v520, 0.0
  %v533 = vmax.f32 %v523, 0.0
  %v534 = vmax.f32 %v525, 0.0
  %v535 = vpack.c.bf16 %v528, %v527
  %v536 = vpack.c.bf16 %v530, %v529
  %v537 = vpack.c.bf16 %v532, %v531
  %v538 = vpack.c.bf16 %v534, %v533
  %v539 = vld [vmem:[%s7] sm:$0x3]
  %v540 = vld [vmem:[%s8] sm:$0xf]
  %542 = vset.pattern.permute.xlu0 0
  %543 = vperm.xlu0 %542, %v540
  %v544 = vpop.permute.xlu0 %543
  %v547 = vsel %vm320, %v539, 0
  %549 = vmatpush.bf16.msra.mxu0 0
  %550 = vmatpush.bf16.msra.mxu0 0
  %551 = vmatpush.bf16.msra.mxu0 0
  %552 = vmatpush.bf16.msra.mxu0 0
  %553 = vmatpush.bf16.msra.mxu0 %v538
  %554 = vmatpush.bf16.msra.mxu0 %v537
  %555 = vmatpush.bf16.msra.mxu0 %v536
  %556 = vmatpush.bf16.msra.mxu0 %v535
  %557 = vmatmul.bf16.gmra.mxu0 %v547
  %v558 = vpop.f32.mrf.mxu0
  %v559 = vadd.f32 %v544, %v558
  %v560 = vpop.f32.mrf.mxu0
  %561 = vdwg.mxu0
  %562 = vst [vmem:[%s9] sm:$0xf] %v559
  // Predicated region
  $region38: #{qnetwork_forward.1} parent=0 // pred_check
    _
  $region39: #{qnetwork_forward.1} parent=0 // pred_check_branch
    %564 = sbr.rel (0) target = $region41
  $region40: #{qnetwork_forward.1} parent=0 // pred_region
    _
  $region41: #{qnetwork_forward.1} parent=0 // pred_fallthru
    _
  // Predicated region
  $region42: #{qnetwork_forward.1} parent=0 // pred_check
    _
  $region43: #{qnetwork_forward.1} parent=0 // pred_check_branch
    %566 = sbr.rel (0) target = $region45
  $region44: #{qnetwork_forward.1} parent=0 // pred_region
    _
  $region45: #{qnetwork_forward.1} parent=0 // pred_fallthru
    _

</llo_original>
